<compile_context>
chip_gen: v6e
topology: v6e:2x2x1
jax: 0.10.0
libtpu: 0.0.40
codegen_flags: <defaults>
</compile_context>

<pallas_src>
import numpy as np

import jax
import jax.numpy as jnp
from jax.experimental import pallas as pl
from jax.experimental.pallas import tpu as pltpu


# ----------------------------------------------------------------------------
# Minimal gridless Pallas kernel: identity copy of one full-array VMEM tile.
# ----------------------------------------------------------------------------
def _identity_kernel(x_ref, o_ref):
    o_ref[...] = x_ref[...]


@jax.jit
def identity_pallas(x: jax.Array) -> jax.Array:
    """Runs `x` through a single gridless Pallas TPU kernel invocation.

    The output aliases the input buffer (input is donated), so no output HBM
    allocation or extra writeback DMA happens.
    """
    return pl.pallas_call(
        _identity_kernel,
        out_shape=jax.ShapeDtypeStruct(x.shape, x.dtype),
        # Full-array, single invocation: no grid, no index_map, no pipelining.
        in_specs=[pl.BlockSpec(memory_space=pltpu.MemorySpace.VMEM)],
        out_specs=pl.BlockSpec(memory_space=pltpu.MemorySpace.VMEM),
        # Alias output 0 onto input 0: no new output buffer, no extra DMA.
        input_output_aliases={0: 0},
    )(x)


# ----------------------------------------------------------------------------
# Faithful translation of Model.forward
# ----------------------------------------------------------------------------
def model_forward():
    # Reference forward() has an empty body and returns None; there is no
    # computation to lower, so no Pallas kernel is launched here.
    return None


if __name__ == "__main__":
    # Deterministic small dummy input (only used to exercise the demo kernel;
    # the reference forward takes no inputs).  (8, 128) = exactly one f32
    # vreg: 8 sublanes x 128 lanes, last dim a multiple of 128 (unmasked vst).
    key = jax.random.PRNGKey(0)
    x = jax.random.normal(key, (8, 128), dtype=jnp.float32)

    # Snapshot to host BEFORE the call: x's device buffer is donated via the
    # input/output alias, so it cannot be used for post-call comparison.
    x_np = np.asarray(x)

    # Exercise the Pallas path and verify the round-trip against the snapshot.
    y = identity_pallas(x)
    jax.block_until_ready(y)
    assert np.allclose(np.asarray(y), x_np), "identity kernel mismatch"

    # Exact-semantics forward: returns None, matching the PyTorch module.
    out = model_forward()
    assert out is None

    print("KERNEL_OK")
</pallas_src>

<mosaic_0001>
module attributes {stable_mosaic.version = 11 : i64} {
  func.func @_identity_kernel(%arg0: memref<8x128xf32, #tpu.memory_space<vmem>>, %arg1: memref<8x128xf32, #tpu.memory_space<vmem>>) attributes {dimension_semantics = [], scalar_prefetch = 0 : i64, scratch_operands = 0 : i64, tpu.core_type = #tpu.core_type<tc>} {
    %c0 = arith.constant 0 : index
    %c0_0 = arith.constant 0 : index
    %0 = vector.load %arg0[%c0, %c0_0] : memref<8x128xf32, #tpu.memory_space<vmem>>, vector<8x128xf32>
    %c0_1 = arith.constant 0 : index
    %c0_2 = arith.constant 0 : index
    %1 = vector.load %arg1[%c0_1, %c0_2] : memref<8x128xf32, #tpu.memory_space<vmem>>, vector<8x128xf32>
    tpu.vector_store %arg1[%c0_1, %c0_2], %0 {strides = array<i32>} : memref<8x128xf32, #tpu.memory_space<vmem>>, vector<8x128xf32>,
    return
  }
}

</mosaic_0001>

<llo_original>
// kernel: identity_pallas.1
$region0: #{identity_pallas.1}
  #allocation0 [shape = 'u32[]', space=smem, size = 0x4, offset = 0x4, fixed_abs, tag = 'smem constant byte address 0x4 - core index']
  #allocation1 [shape = 'u32[144,128]{1,0:T(1,128)}', space=vmem, size = 0x12000, scoped, tag = 'internal scratch']
  %s0 = inlined_call_operand.hbm [shape: f32[8,128], index: 0, kind: input, shape index: {}, may-alias: {0,1}]
  %s1 = inlined_call_operand.hbm [shape: f32[8,128], index: 1, kind: output, shape index: {}, may-alias: {0,1}]
  %s2 = sld [smem:[#allocation0]]
  $region18: #{identity_pallas.1} parent=0
    _
  %s4 = ssub.s32 1, %s2
  %s5 = scalar_select 0, %s4, %s2
  $region1: #{identity_pallas.1} parent=0
    #allocation2 [shape = 'u8[4096]{0}', space=vmem, size = 0x1000, scoped, tag = 'input window, operand 0, single buffered']
    #allocation3 [shape = 's32[1]{0}', space=sflag, size = 0x4, scoped, tag = 'scoped memory for identity_pallas.1']
    #allocation4 [shape = 's32[1]{0}', space=sflag, size = 0x4, scoped, tag = 'scoped memory for identity_pallas.1']
    #allocation5 [shape = 'u8[4096]{0}', space=vmem, size = 0x1000, scoped, tag = 'output window, operand 0, single buffered']
    %6 = vsyncpa [#allocation3], 0
    %7 = vsyncpa [#allocation4], 0
    // Predicated region
    $region2: #{identity_pallas.1} parent=1 // pred_check
      _
    $region3: #{identity_pallas.1} parent=1 // pred_check_branch
      %9 = sbr.rel (0) target = $region5
    $region4: #{identity_pallas.1} parent=1 // pred_region
      %s11 = ssub.s32 128, 128
      %12 = vsyncadd [#allocation3], %s11
      %s14 = sshll.u32 [#allocation2], 4
      %s15 = int_to_ptr.vmem [resolvable:$true] %s14
      %17 = dma.hbm_to_vmem [thread:$0]  %s0, 128, %s15, [#allocation3]
    $region5: #{identity_pallas.1} parent=1 // pred_fallthru
      _
    // Predicated region
    $region6: #{identity_pallas.1} parent=1 // pred_check
      _
    $region7: #{identity_pallas.1} parent=1 // pred_check_branch
      %19 = sbr.rel (0) target = $region9
    $region8: #{identity_pallas.1} parent=1 // pred_region
      %20 = dma.done [#allocation3], 128
    $region9: #{identity_pallas.1} parent=1 // pred_fallthru
      _
    %v21 = vld [vmem:[#allocation2] sm:$0xff]
    %22 = vst [vmem:[#allocation5] sm:$0xff] %v21
    // Predicated region
    $region10: #{identity_pallas.1} parent=1 // pred_check
      _
    $region11: #{identity_pallas.1} parent=1 // pred_check_branch
      %24 = sbr.rel (0) target = $region13
    $region12: #{identity_pallas.1} parent=1 // pred_region
      %s26 = ssub.s32 128, 128
      %27 = vsyncadd [#allocation4], %s26
      %s29 = sshll.u32 [#allocation5], 4
      %s30 = int_to_ptr.vmem [resolvable:$true] %s29
      %32 = dma.vmem_to_hbm [thread:$0]  %s30, 128, %s1, [#allocation4]
    $region13: #{identity_pallas.1} parent=1 // pred_fallthru
      _
    // Predicated region
    $region14: #{identity_pallas.1} parent=1 // pred_check
      _
    $region15: #{identity_pallas.1} parent=1 // pred_check_branch
      %34 = sbr.rel (0) target = $region17
    $region16: #{identity_pallas.1} parent=1 // pred_region
      %35 = dma.done [#allocation4], 128
    $region17: #{identity_pallas.1} parent=1 // pred_fallthru
      _
    %36 = vsyncpa [#allocation3], 1
    %37 = vsyncpa [#allocation4], 1

</llo_original>
